<compile_context>
chip_gen: v5e
topology: v5e:2x2
jax: 0.10.0
libtpu: 0.0.40
codegen_flags: <defaults>
</compile_context>

<pallas_src>
import math

import jax
import jax.numpy as jnp
from jax.experimental import pallas as pl
from jax.experimental.pallas import tpu as pltpu

_LANE = 128
_SUBLANE_F32 = 8
_DEFAULT_BLOCK_BYTES = 8 * 1024 * 1024   # v5e / v6e target (<5% per-step overhead)
_V7X_BLOCK_BYTES = 16 * 1024 * 1024      # v7x: 3.2 TB/s HBM -> bigger tiles; 2x16 MiB fits 64 MiB VMEM


def _target_block_bytes() -> int:
    """Generation-aware output-block target (bytes). Falls back to 8 MiB (safe everywhere)."""
    try:
        info = pltpu.get_tpu_info()
        vmem = getattr(info, "vmem_capacity_bytes", None)
        if vmem is not None and vmem <= 96 * 1024 * 1024:
            # v7x-class part (64 MiB VMEM, very fast HBM): larger tiles amortize the
            # per-step overhead and 2x16 MiB double-buffer still leaves headroom.
            return _V7X_BLOCK_BYTES
    except Exception:
        pass
    return _DEFAULT_BLOCK_BYTES


def _sublane_align(itemsize: int) -> int:
    """Sublane alignment for the second-minor dim: 8 (f32), 16 (bf16), 32 (int8/fp8)."""
    return max(_SUBLANE_F32, 32 // max(1, int(itemsize)))


def _bias_broadcast_kernel(bias_ref, o_ref):
    # bias_ref: (1, tf) in VMEM; o_ref: (tb, tf) in VMEM.
    # Pure broadcast + store: vst pressure is fully hidden under the output DMA.
    o_ref[...] = jnp.broadcast_to(bias_ref[...], o_ref.shape)


def _broadcast_rows(row: jax.Array, n_rows: int) -> jax.Array:
    """Broadcast a (W,) row to (n_rows, W) with a tiled, pipelined Pallas kernel."""
    W = int(row.shape[0])
    dtype = row.dtype
    itemsize = int(jnp.dtype(dtype).itemsize)

    target = _target_block_bytes()
    sub = _sublane_align(itemsize)

    # Lane (feature) tile: prefer the full feature dim so each output row is one
    # contiguous HBM burst; only tile F when a single sublane-aligned stripe of W
    # would exceed the block budget.
    stripe_bytes = sub * W * itemsize
    if stripe_bytes <= target:
        tf = W
    else:
        tf = max(_LANE, (target // (sub * itemsize) // _LANE) * _LANE)

    # Sublane (batch) tile: fill the block budget, dtype-aligned. No divisibility
    # requirement — pl.cdiv grid + Pallas's ragged last block handle the remainder.
    tb_target = max(sub, target // (tf * itemsize))
    if n_rows <= tb_target:
        tb = n_rows                              # equals full dim -> always legal
    else:
        tb = max(sub, (tb_target // sub) * sub)  # sublane-aligned multiple

    # Grid: F outermost, B innermost -> bias block index constant over the inner
    # loop, so the (1, tf) bias tile is DMA'd once per F tile.
    grid = (pl.cdiv(W, tf), pl.cdiv(n_rows, tb))

    # Scoped VMEM: double-buffered output block + double-buffered bias tile + margin.
    vmem_limit = 2 * (tb * tf + tf) * itemsize + (4 << 20)
    vmem_limit = max(vmem_limit, 24 << 20)

    row_2d = row.reshape(1, W)

    return pl.pallas_call(
        _bias_broadcast_kernel,
        out_shape=jax.ShapeDtypeStruct((n_rows, W), dtype),
        grid=grid,
        in_specs=[pl.BlockSpec((1, tf), lambda j, i: (0, j))],
        out_specs=pl.BlockSpec((tb, tf), lambda j, i: (i, j)),
        compiler_params=pltpu.CompilerParams(
            # "parallel" axes are shardable across v7x's 2 TensorCores; harmless on
            # single-TC v5e/v6e.
            dimension_semantics=("parallel", "parallel"),
            vmem_limit_bytes=int(vmem_limit),
        ),
        cost_estimate=pl.CostEstimate(
            flops=0,
            transcendentals=0,
            bytes_accessed=(n_rows * W + W) * itemsize,
        ),
    )(row_2d)


def bias_forward(x: jax.Array, bias: jax.Array) -> jax.Array:
    """Equivalent of Bias.forward: bias.unsqueeze(0).expand(x.size(0), -1).

    x:    (B, in_features)  -- only the batch size is used, matching PyTorch.
    bias: (out_features,)
    returns: (B, out_features), dtype of `bias`.
    """
    B = int(x.shape[0])
    F = int(bias.shape[0])

    # Lane-dense repack for narrow features: an output last-dim < 128 lowers to
    # masked partial stores at low lane utilization. Pack `rep` bias copies into one
    # 128-wide lane row, broadcast over ceil(B/rep) rows, un-fold, and slice off the
    # batch padding (every repacked row is identical, so padding is exact).
    if F < _LANE and _LANE % F == 0:
        rep = _LANE // F
        rows = (B + rep - 1) // rep
        wide = _broadcast_rows(jnp.tile(bias, rep), rows)   # (rows, F*rep)
        return wide.reshape(rows * rep, F)[:B]

    return _broadcast_rows(bias, B)


def init_bias(key: jax.Array, in_features: int, out_features: int, dtype=jnp.float32):
    """Deterministic replica of the PyTorch __init__: U(-1/sqrt(in), +1/sqrt(in))."""
    bound = 1.0 / math.sqrt(in_features)
    return jax.random.uniform(
        key, (out_features,), dtype=dtype, minval=-bound, maxval=bound
    )


if __name__ == "__main__":
    key = jax.random.PRNGKey(0)
    k_bias, k_x = jax.random.split(key)

    # Small shapes consistent with the module.
    B = 2
    in_features = 32
    out_features = 32

    bias = init_bias(k_bias, in_features, out_features)
    x = jax.random.normal(k_x, (B, in_features), dtype=jnp.float32)

    out = jax.block_until_ready(bias_forward(x, bias))
    ref = jnp.broadcast_to(bias[None, :], (B, out_features))
    assert out.shape == (B, out_features)
    assert out.dtype == bias.dtype
    assert jnp.array_equal(out, ref), "Pallas output does not match reference"

    # Also exercise: (a) multi-block tiled path with a ragged last batch block,
    # (b) narrow-F lane-dense repack with B not divisible by the repack factor,
    # (c) bf16 (dtype-dependent sublane alignment).
    checks = [
        (4100, 1024, jnp.float32),  # ragged tiling (4100 = 2*2048 + 4)
        (9, 64, jnp.float32),       # narrow-F repack, B % rep != 0
        (100, 256, jnp.bfloat16),   # bf16 path
    ]
    for b2, f2, dt in checks:
        bias2 = init_bias(jax.random.PRNGKey(1), f2, f2, dtype=dt)
        x2 = jnp.zeros((b2, 1), dtype=jnp.float32)
        out2 = jax.block_until_ready(bias_forward(x2, bias2))
        ref2 = jnp.broadcast_to(bias2[None, :], (b2, f2))
        assert out2.shape == (b2, f2)
        assert out2.dtype == bias2.dtype
        assert jnp.array_equal(out2, ref2), f"mismatch at shape ({b2}, {f2}, {dt})"

    print("KERNEL_OK")
</pallas_src>

<mosaic_0001>
module attributes {stable_mosaic.version = 11 : i64} {
  func.func @_bias_broadcast_kernel(%arg0: i32, %arg1: i32, %arg2: memref<1x128xf32, #tpu.memory_space<vmem>>, %arg3: memref<1x128xf32, #tpu.memory_space<vmem>>) attributes {dimension_semantics = [#tpu.dimension_semantics<parallel>, #tpu.dimension_semantics<parallel>], iteration_bounds = array<i64: 1, 1>, scalar_prefetch = 0 : i64, scratch_operands = 0 : i64, tpu.core_type = #tpu.core_type<tc>, window_params = [{transform_indices = @transform_0, window_bounds = array<i64: 1, 128>}, {transform_indices = @transform_1, window_bounds = array<i64: 1, 128>}]} {
    %c0 = arith.constant 0 : index
    %c0_0 = arith.constant 0 : index
    %0 = vector.load %arg2[%c0, %c0_0] : memref<1x128xf32, #tpu.memory_space<vmem>>, vector<1x128xf32>
    %c0_1 = arith.constant 0 : index
    %c0_2 = arith.constant 0 : index
    %1 = vector.load %arg3[%c0_1, %c0_2] : memref<1x128xf32, #tpu.memory_space<vmem>>, vector<1x128xf32>
    tpu.vector_store %arg3[%c0_1, %c0_2], %0 {strides = array<i32>} : memref<1x128xf32, #tpu.memory_space<vmem>>, vector<1x128xf32>,
    return
  }
  func.func @transform_0(%arg0: i32, %arg1: i32) -> (i32, i32) {
    %c0_i32 = arith.constant 0 : i32
    %c0_i32_0 = arith.constant 0 : i32
    return %c0_i32, %arg0 : i32, i32
  }
  func.func @transform_1(%arg0: i32, %arg1: i32) -> (i32, i32) {
    %c0_i32 = arith.constant 0 : i32
    return %arg1, %arg0 : i32, i32
  }
}

</mosaic_0001>

<llo_original>
// kernel: tpu_custom_call.1
$region0: #{tpu_custom_call.1}
  #allocation0 [shape = 'u32[]', space=smem, size = 0x4, offset = 0x4, fixed_abs, tag = 'smem constant byte address 0x4 - core index']
  #allocation1 [shape = 'u32[72,128]{1,0:T(1,128)}', space=vmem, size = 0x9000, scoped, tag = 'internal scratch']
  %s0 = inlined_call_operand.hbm [shape: f32[1,128], index: 0, kind: input, shape index: {}]
  %s1 = inlined_call_operand.hbm [shape: f32[1,128], index: 1, kind: output, shape index: {}]
  %s2 = sld [smem:[#allocation0]]
  $region18: #{tpu_custom_call.1} parent=0
    _
  %s4 = ssub.s32 1, %s2
  %s5 = scalar_select 0, %s4, %s2
  $region1: #{tpu_custom_call.1} parent=0
    #allocation2 [shape = 'u8[512]{0}', space=vmem, size = 0x400, scoped, tag = 'input window, operand 0, single buffered']
    #allocation3 [shape = 's32[1]{0}', space=sflag, size = 0x4, scoped, tag = 'scoped memory for tpu_custom_call.1']
    #allocation4 [shape = 's32[1]{0}', space=sflag, size = 0x4, scoped, tag = 'scoped memory for tpu_custom_call.1']
    #allocation5 [shape = 'u8[512]{0}', space=vmem, size = 0x400, scoped, tag = 'output window, operand 0, single buffered']
    %6 = vsyncpa [#allocation3], 0
    %7 = vsyncpa [#allocation4], 0
    // Predicated region
    $region2: #{tpu_custom_call.1} parent=1 // pred_check
      _
    $region3: #{tpu_custom_call.1} parent=1 // pred_check_branch
      %9 = sbr.rel (0) target = $region5
    $region4: #{tpu_custom_call.1} parent=1 // pred_region
      %11 = vsyncadd [#allocation3], 0
      %s13 = sshll.u32 %s0, 4
      %s14 = int_to_ptr.hbm [resolvable:$true] %s13
      %s15 = sshll.u32 [#allocation2], 4
      %s16 = int_to_ptr.vmem [resolvable:$true] %s15
      %18 = dma.hbm_to_vmem [thread:$0]  %s14, 16, %s16, [#allocation3]
    $region5: #{tpu_custom_call.1} parent=1 // pred_fallthru
      _
    // Predicated region
    $region6: #{tpu_custom_call.1} parent=1 // pred_check
      _
    $region7: #{tpu_custom_call.1} parent=1 // pred_check_branch
      %20 = sbr.rel (0) target = $region9
    $region8: #{tpu_custom_call.1} parent=1 // pred_region
      %22 = dma.done [#allocation3], 16
    $region9: #{tpu_custom_call.1} parent=1 // pred_fallthru
      _
    %v23 = vld [vmem:[#allocation2] sm:$0x1]
    %24 = vst [vmem:[#allocation5] sm:$0x1] %v23
    // Predicated region
    $region10: #{tpu_custom_call.1} parent=1 // pred_check
      _
    $region11: #{tpu_custom_call.1} parent=1 // pred_check_branch
      %26 = sbr.rel (0) target = $region13
    $region12: #{tpu_custom_call.1} parent=1 // pred_region
      %28 = vsyncadd [#allocation4], 0
      %s30 = sshll.u32 [#allocation5], 4
      %s31 = int_to_ptr.vmem [resolvable:$true] %s30
      %s32 = sshll.u32 %s1, 4
      %s33 = int_to_ptr.hbm [resolvable:$true] %s32
      %35 = dma.vmem_to_hbm [thread:$0]  %s31, 16, %s33, [#allocation4]
    $region13: #{tpu_custom_call.1} parent=1 // pred_fallthru
      _
    // Predicated region
    $region14: #{tpu_custom_call.1} parent=1 // pred_check
      _
    $region15: #{tpu_custom_call.1} parent=1 // pred_check_branch
      %37 = sbr.rel (0) target = $region17
    $region16: #{tpu_custom_call.1} parent=1 // pred_region
      %39 = dma.done [#allocation4], 16
    $region17: #{tpu_custom_call.1} parent=1 // pred_fallthru
      _
    %40 = vsyncpa [#allocation3], 1
    %41 = vsyncpa [#allocation4], 1

</llo_original>
